<compile_context>
chip_gen: v7x
topology: tpu7x:2x2x1
jax: 0.10.0
libtpu: 0.0.40
codegen_flags: <defaults>
</compile_context>

<pallas_src>
import jax
import jax.numpy as jnp
from jax.experimental import pallas as pl
from jax.experimental.pallas import tpu as pltpu

_MiB = 1024 * 1024


def _attention_kernel(x_ref, mask_ref, w_ref, out_ref):
    # x_ref:    (TB, S, D)  slab of TB batch rows
    # mask_ref: (TB, S)     mask (0 = padded, nonzero = valid), any numeric dtype
    # w_ref:    (1, D)      linear projection weight (shared across grid)
    # out_ref:  (TB, D)     attention-pooled output (lane-dense)
    x = x_ref[...].astype(jnp.float32)                 # (TB, S, D)
    m = mask_ref[...].astype(jnp.float32)              # (TB, S)
    w = w_ref[...].astype(jnp.float32)                 # (1, D)

    # logits_bs = sum_d w_d * x_bsd  -> (TB, S); VPU multiply + lane reduce
    # (avoids a degenerate 1-row matmul on the MXU).
    logits = jnp.sum(x * w[None, :, :], axis=-1)       # (TB, S)

    # masked softmax over the sequence axis (matches masked_softmax in torch).
    masked_logits = jnp.where(m == 0.0, jnp.float32(-1e9), logits)
    max_logits = jnp.max(masked_logits, axis=-1, keepdims=True)     # (TB, 1)
    masked_exps = jnp.exp(masked_logits - max_logits) * m           # (TB, S)
    masked_sums = jnp.sum(masked_exps, axis=-1, keepdims=True) + jnp.float32(1e-9)

    # Unnormalized weighted sum over sequence, then one exact divide per row
    # (TB scalars broadcast over D; fully hidden under the x DMA).
    pooled = jnp.sum(masked_exps[:, :, None] * x, axis=1)           # (TB, D)
    out_ref[...] = (pooled / masked_sums).astype(out_ref.dtype)


def _attention_kernel_nomask(x_ref, w_ref, out_ref):
    # Plain-softmax path (mask is None): no mask DMA, no where/multiply pass.
    x = x_ref[...].astype(jnp.float32)                 # (TB, S, D)
    w = w_ref[...].astype(jnp.float32)                 # (1, D)

    logits = jnp.sum(x * w[None, :, :], axis=-1)       # (TB, S)
    max_logits = jnp.max(logits, axis=-1, keepdims=True)
    exps = jnp.exp(logits - max_logits)
    sums = jnp.sum(exps, axis=-1, keepdims=True)

    pooled = jnp.sum(exps[:, :, None] * x, axis=1)     # (TB, D)
    out_ref[...] = (pooled / sums).astype(out_ref.dtype)


def _round_up(v, m):
    return ((v + m - 1) // m) * m


def _device_defaults():
    """(target padded-tile bytes, vmem_limit_bytes, min grid steps) per TPU gen."""
    try:
        kind = jax.devices()[0].device_kind.lower()
    except Exception:
        kind = ""
    if "v7" in kind or "7x" in kind:
        # 64 MiB physical VMEM/TC, 3.2 TB/s HBM, 2 TCs -> big tile, >=2 grid steps.
        return 8 * _MiB, 48 * _MiB, 2
    if "v6" in kind:
        return 8 * _MiB, 64 * _MiB, 1
    if "v5 lite" in kind or "v5e" in kind or "v5lite" in kind:
        return 3 * _MiB, 48 * _MiB, 1
    # Unknown / interpret mode: conservative values that fit every generation.
    return 4 * _MiB, 48 * _MiB, 1


def _choose_batch_tile(B, S, D, target_tile_bytes, min_grid_steps=1):
    """Pick TB from the *padded* VMEM footprint of one batch row of x.

    Padded footprint per batch row: sublane dim rounds up to 8, lane dim to
    128, f32 compute.  Total per-step VMEM ~= 4x the x tile (2x double-buffer
    + ~2 tile-sized in-kernel temporaries) + small mask/out/w buffers, which
    the per-generation vmem_limit_bytes comfortably covers.
    """
    per_row = _round_up(S, 8) * _round_up(D, 128) * 4
    tb = max(1, target_tile_bytes // per_row)
    # Megacore (v7x): keep at least `min_grid_steps` grid steps so the
    # "parallel" axis can be sharded across TensorCores.
    if min_grid_steps > 1 and B >= 16:
        cap = max(8, (_round_up(B, min_grid_steps) // min_grid_steps // 8) * 8)
        tb = min(tb, cap)
    if tb >= B:
        return B
    # mask/out blocks put TB on the sublane axis -> multiple of 8 (or == B).
    tb = max(8, (tb // 8) * 8)
    return B if tb >= B else tb


def basic_attention(x, w, mask=None, *, target_tile_bytes=None):
    """x: (B, S, D), w: (1, D), mask: (B, S) (any numeric/bool dtype) or None."""
    B, S, D = x.shape
    w = jnp.reshape(w, (1, D))

    auto_tile, vmem_limit, min_steps = _device_defaults()
    if target_tile_bytes is None:
        target_tile_bytes = auto_tile

    tb = _choose_batch_tile(B, S, D, target_tile_bytes, min_steps)
    grid = (pl.cdiv(B, tb),)   # ragged last block; no wrapper-side padding copy

    compiler_params = pltpu.CompilerParams(
        dimension_semantics=("parallel",),
        vmem_limit_bytes=vmem_limit,
    )

    if mask is None:
        return pl.pallas_call(
            _attention_kernel_nomask,
            out_shape=jax.ShapeDtypeStruct((B, D), x.dtype),
            grid_spec=pltpu.PrefetchScalarGridSpec(
                num_scalar_prefetch=0,
                grid=grid,
                in_specs=[
                    pl.BlockSpec((tb, S, D), lambda b: (b, 0, 0)),   # x slab
                    pl.BlockSpec((1, D), lambda b: (0, 0)),          # w (shared)
                ],
                out_specs=pl.BlockSpec((tb, D), lambda b: (b, 0)),   # lane-dense out
            ),
            compiler_params=compiler_params,
        )(x, w)

    if jnp.issubdtype(mask.dtype, jnp.bool_):
        mask = mask.astype(jnp.int8)   # cheap, 1/4 the mask HBM traffic vs f32

    return pl.pallas_call(
        _attention_kernel,
        out_shape=jax.ShapeDtypeStruct((B, D), x.dtype),
        grid_spec=pltpu.PrefetchScalarGridSpec(
            num_scalar_prefetch=0,
            grid=grid,
            in_specs=[
                pl.BlockSpec((tb, S, D), lambda b: (b, 0, 0)),       # x slab
                pl.BlockSpec((tb, S), lambda b: (b, 0)),             # mask (2-D)
                pl.BlockSpec((1, D), lambda b: (0, 0)),              # w (shared)
            ],
            out_specs=pl.BlockSpec((tb, D), lambda b: (b, 0)),       # lane-dense out
        ),
        compiler_params=compiler_params,
    )(x, mask, w)


def _reference(x, w, mask):
    """Pure-JAX reference mirroring the PyTorch forward."""
    logits = jnp.einsum("bsd,kd->bs", x, w)
    if mask is None:
        att = jax.nn.softmax(logits, axis=1)
    else:
        m = mask.astype(jnp.float32)
        masked_logits = jnp.where(m == 0, -1e9, logits)
        mx = jnp.max(masked_logits, axis=1, keepdims=True)
        exps = jnp.exp(masked_logits - mx)
        masked_exps = exps * m
        sums = jnp.sum(masked_exps, axis=1, keepdims=True) + 1e-9
        att = masked_exps / sums
    return jnp.einsum("bs,bsd->bd", att, x)


if __name__ == "__main__":
    key = jax.random.PRNGKey(0)
    B, S, D = 2, 8, 32  # batch, seq, state_size

    kx, kw = jax.random.split(key)
    x = jax.random.normal(kx, (B, S, D), dtype=jnp.float32)

    # Deterministic "xavier-uniform"-style init for the (1, D) linear weight.
    bound = (6.0 / (D + 1)) ** 0.5
    w = jax.random.uniform(kw, (1, D), dtype=jnp.float32,
                           minval=-bound, maxval=bound)

    # Mask: last two positions of batch 1 are padded; batch 0 fully valid.
    mask = jnp.ones((B, S), dtype=jnp.float32)
    mask = mask.at[1, S - 2:].set(0.0)

    # Masked path.
    out = basic_attention(x, w, mask)
    jax.block_until_ready(out)
    ref = _reference(x, w, mask)
    assert out.shape == (B, D)
    assert jnp.allclose(out, ref, atol=1e-5, rtol=1e-5), "mismatch vs reference (masked)"

    # Unmasked (plain softmax) path.
    out_nm = basic_attention(x, w, None)
    jax.block_until_ready(out_nm)
    ref_nm = _reference(x, w, None)
    assert jnp.allclose(out_nm, ref_nm, atol=1e-5, rtol=1e-5), "mismatch vs reference (unmasked)"

    print("KERNEL_OK")
</pallas_src>

<mosaic_0001>
module attributes {stable_mosaic.version = 11 : i64} {
  func.func @_attention_kernel(%arg0: i32, %arg1: memref<2x8x32xf32, #tpu.memory_space<vmem>>, %arg2: memref<2x8xf32, #tpu.memory_space<vmem>>, %arg3: memref<1x32xf32, #tpu.memory_space<vmem>>, %arg4: memref<2x32xf32, #tpu.memory_space<vmem>>) attributes {dimension_semantics = [#tpu.dimension_semantics<parallel>], iteration_bounds = array<i64: 1>, scalar_prefetch = 0 : i64, scratch_operands = 0 : i64, tpu.core_type = #tpu.core_type<tc>, window_params = [{transform_indices = @transform_0, window_bounds = array<i64: 2, 8, 32>}, {transform_indices = @transform_1, window_bounds = array<i64: 2, 8>}, {pipeline_mode = #tpu.pipeline_mode<synchronous>, transform_indices = @transform_2, window_bounds = array<i64: 1, 32>}, {transform_indices = @transform_3, window_bounds = array<i64: 2, 32>}]} {
    %c0 = arith.constant 0 : index
    %c0_0 = arith.constant 0 : index
    %c0_1 = arith.constant 0 : index
    %0 = vector.load %arg1[%c0, %c0_0, %c0_1] : memref<2x8x32xf32, #tpu.memory_space<vmem>>, vector<2x8x32xf32>
    %c0_2 = arith.constant 0 : index
    %c0_3 = arith.constant 0 : index
    %1 = vector.load %arg2[%c0_2, %c0_3] : memref<2x8xf32, #tpu.memory_space<vmem>>, vector<2x8xf32>
    %c0_4 = arith.constant 0 : index
    %c0_5 = arith.constant 0 : index
    %2 = vector.load %arg3[%c0_4, %c0_5] : memref<1x32xf32, #tpu.memory_space<vmem>>, vector<1x32xf32>
    %3 = vector.shape_cast %2 : vector<1x32xf32> to vector<1x1x32xf32>
    %4 = vector.broadcast %3 : vector<1x1x32xf32> to vector<2x8x32xf32>
    %5 = arith.mulf %0, %4 : vector<2x8x32xf32>
    %cst = arith.constant dense<0.000000e+00> : vector<2x8xf32>
    %6 = vector.multi_reduction <add>, %5, %cst [2] : vector<2x8x32xf32> to vector<2x8xf32>
    %cst_6 = arith.constant 0.000000e+00 : f32
    %7 = vector.broadcast %cst_6 : f32 to vector<2x8xf32>
    %8 = arith.cmpf oeq, %1, %7 : vector<2x8xf32>
    %cst_7 = arith.constant -1.000000e+09 : f32
    %9 = vector.broadcast %cst_7 : f32 to vector<2x8xf32>
    %10 = arith.select %8, %9, %6 : vector<2x8xi1>, vector<2x8xf32>
    %cst_8 = arith.constant dense<0xFF800000> : vector<2xf32>
    %11 = vector.multi_reduction <maximumf>, %10, %cst_8 [1] : vector<2x8xf32> to vector<2xf32>
    %12 = vector.shape_cast %11 : vector<2xf32> to vector<2x1xf32>
    %13 = vector.broadcast %12 : vector<2x1xf32> to vector<2x8xf32>
    %14 = arith.subf %10, %13 : vector<2x8xf32>
    %15 = math.exp %14 : vector<2x8xf32>
    %16 = arith.mulf %15, %1 : vector<2x8xf32>
    %cst_9 = arith.constant dense<0.000000e+00> : vector<2xf32>
    %17 = vector.multi_reduction <add>, %16, %cst_9 [1] : vector<2x8xf32> to vector<2xf32>
    %18 = vector.shape_cast %17 : vector<2xf32> to vector<2x1xf32>
    %cst_10 = arith.constant 9.99999971E-10 : f32
    %19 = vector.broadcast %cst_10 : f32 to vector<2x1xf32>
    %20 = arith.addf %18, %19 : vector<2x1xf32>
    %21 = vector.shape_cast %16 : vector<2x8xf32> to vector<2x8x1xf32>
    %22 = vector.broadcast %21 : vector<2x8x1xf32> to vector<2x8x32xf32>
    %23 = arith.mulf %22, %0 : vector<2x8x32xf32>
    %cst_11 = arith.constant dense<0.000000e+00> : vector<2x32xf32>
    %24 = vector.multi_reduction <add>, %23, %cst_11 [1] : vector<2x8x32xf32> to vector<2x32xf32>
    %25 = vector.broadcast %20 : vector<2x1xf32> to vector<2x32xf32>
    %26 = arith.divf %24, %25 : vector<2x32xf32>
    %c0_12 = arith.constant 0 : index
    %c0_13 = arith.constant 0 : index
    %27 = vector.load %arg4[%c0_12, %c0_13] : memref<2x32xf32, #tpu.memory_space<vmem>>, vector<2x32xf32>
    tpu.vector_store %arg4[%c0_12, %c0_13], %26 {strides = array<i32>} : memref<2x32xf32, #tpu.memory_space<vmem>>, vector<2x32xf32>,
    return
  }
  func.func @transform_0(%arg0: i32) -> (i32, i32, i32) {
    %c0_i32 = arith.constant 0 : i32
    %c0_i32_0 = arith.constant 0 : i32
    %c0_i32_1 = arith.constant 0 : i32
    return %arg0, %c0_i32, %c0_i32_0 : i32, i32, i32
  }
  func.func @transform_1(%arg0: i32) -> (i32, i32) {
    %c0_i32 = arith.constant 0 : i32
    %c0_i32_0 = arith.constant 0 : i32
    return %arg0, %c0_i32 : i32, i32
  }
  func.func @transform_2(%arg0: i32) -> (i32, i32) {
    %c0_i32 = arith.constant 0 : i32
    %c0_i32_0 = arith.constant 0 : i32
    %c0_i32_1 = arith.constant 0 : i32
    return %c0_i32, %c0_i32_0 : i32, i32
  }
  func.func @transform_3(%arg0: i32) -> (i32, i32) {
    %c0_i32 = arith.constant 0 : i32
    %c0_i32_0 = arith.constant 0 : i32
    return %arg0, %c0_i32 : i32, i32
  }
}

</mosaic_0001>

<llo_original>
// kernel: tpu_custom_call.1
$region0: #{tpu_custom_call.1}
  #allocation0 [shape = 'u32[]', space=smem, size = 0x4, offset = 0x4, fixed_abs, tag = 'smem constant byte address 0x4 - core index']
  #allocation1 [shape = 'u32[144,128]{1,0:T(1,128)}', space=vmem, size = 0x12000, scoped, tag = 'internal scratch']
  %s0 = inlined_call_operand.hbm [shape: f32[2,8,32], index: 0, kind: input, shape index: {}]
  %s1 = inlined_call_operand.vmem [shape: f32[2,8], index: 1, kind: input, shape index: {}]
  %s2 = inlined_call_operand.vmem [shape: f32[1,32], index: 2, kind: input, shape index: {}]
  %s3 = inlined_call_operand.hbm [shape: f32[2,32], index: 3, kind: output, shape index: {}]
  %s4 = sld [smem:[#allocation0]]
  $region26: #{tpu_custom_call.1} parent=0
    _
  %s6 = ssub.s32 1, %s4
  %s7 = scalar_select 0, %s6, %s4
  $region1: #{tpu_custom_call.1} parent=0
    #allocation2 [shape = 'u8[8192]{0}', space=vmem, size = 0x2000, scoped, tag = 'input window, operand 0, single buffered']
    #allocation3 [shape = 's32[1]{0}', space=sflag, size = 0x4, scoped, tag = 'scoped memory for tpu_custom_call.1']
    #allocation4 [shape = 's32[1]{0}', space=sflag, size = 0x4, scoped, tag = 'scoped memory for tpu_custom_call.1']
    #allocation5 [shape = 'u8[1024]{0}', space=vmem, size = 0x400, scoped, tag = 'output window, operand 0, single buffered']
    %8 = vsyncpa [#allocation3], 0
    %9 = vsyncpa [#allocation4], 0
    // Predicated region
    $region2: #{tpu_custom_call.1} parent=1 // pred_check
      _
    $region3: #{tpu_custom_call.1} parent=1 // pred_check_branch
      %11 = sbr.rel (0) target = $region5
    $region4: #{tpu_custom_call.1} parent=1 // pred_region
      %s13 = ssub.s32 256, 256
      %14 = vsyncadd [#allocation3], %s13
      %s15 = sshll.u32 [#allocation2], 4
      %s16 = int_to_ptr.vmem [resolvable:$true] %s15
      %21 = dma.hbm_to_vmem [thread:$0]  %s0, 256, %s16, [#allocation3], 128, 128, 8
    $region5: #{tpu_custom_call.1} parent=1 // pred_fallthru
      _
    // Predicated region
    $region6: #{tpu_custom_call.1} parent=1 // pred_check
      _
    $region7: #{tpu_custom_call.1} parent=1 // pred_check_branch
      %23 = sbr.rel (0) target = $region9
    $region8: #{tpu_custom_call.1} parent=1 // pred_region
      _
    $region9: #{tpu_custom_call.1} parent=1 // pred_fallthru
      _
    // Predicated region
    $region10: #{tpu_custom_call.1} parent=1 // pred_check
      _
    $region11: #{tpu_custom_call.1} parent=1 // pred_check_branch
      %25 = sbr.rel (0) target = $region13
    $region12: #{tpu_custom_call.1} parent=1 // pred_region
      _
    $region13: #{tpu_custom_call.1} parent=1 // pred_fallthru
      _
    // Predicated region
    $region14: #{tpu_custom_call.1} parent=1 // pred_check
      _
    $region15: #{tpu_custom_call.1} parent=1 // pred_check_branch
      %27 = sbr.rel (0) target = $region17
    $region16: #{tpu_custom_call.1} parent=1 // pred_region
      %28 = dma.done [#allocation3], 256
    $region17: #{tpu_custom_call.1} parent=1 // pred_fallthru
      _
    %v29 = vld [vmem:[#allocation2] sm:$0xff]
    %v30 = vld [vmem:[#allocation2 + $0x8] sm:$0xff]
    %v31 = vld [vmem:[%s1] sm:$0x3]
    %v32 = vld [vmem:[%s2] sm:$0x1]
    %v34 = vlaneseq
    %v35 = vshrl.u32 %v34, 7
    %v36 = vsub.s32 0, %v35
    %v37 = vrot.slane %v32, %v36
    %v39 = vmul.f32 %v29, %v37
    %v40 = vmul.f32 %v30, %v37
    %vm41 = vcmask 261120
    %v42 = vsel %vm41, %v39, 0.0
    %43 = vadd.xlane.f32.xlu0 %v42
    %v44 = vpop.xlane.xlu0 %43
    %v45 = vsel %vm41, %v40, 0.0
    %46 = vadd.xlane.f32.xlu0 %v45
    %v47 = vpop.xlane.xlu0 %46
    %vm48 = vcmp.eq.f32.partialorder %v31, 0.0
    %v51 = vlaneseq
    %v52 = vand.u32 %v51, 127
    %v53 = vlaneseq
    %v54 = vshrl.u32 %v53, 7
    %v55 = vsub.s32 %v52, %v54
    %v56 = vrot.slane %v44, %v55
    %v57 = vlaneseq
    %v58 = vshrl.u32 %v57, 7
    %v59 = vsub.s32 %v52, %v58
    %v60 = vrot.slane %v47, %v59
    %vm61 = vcmask 1041409
    %v62 = vsel %vm61, %v60, %v56
    %v64 = vsel %vm48, -1e+09, %v62
    %vm65 = vcmask 58368
    %v66 = vsel %vm65, %v64, -inf
    %67 = vmax.xlane.f32.xlu0 %v66
    %v68 = vpop.xlane.xlu0 %67
    %v69 = vsub.f32 %v64, %v68
    %v70 = vmul.f32 %v69, 1.442695
    %v71 = vpow.pop %v70
    %v72 = vmul.f32 %v71, %v31
    %v73 = vsel %vm65, %v72, 0.0
    %74 = vadd.xlane.f32.xlu0 %v73
    %v75 = vpop.xlane.xlu0 %74
    %v76 = vadd.f32 %v75, 1e-09
    %v77 = vlaneseq
    %v78 = vshrl.u32 %v77, 7
    %v79 = vsub.s32 0, %v78
    %v80 = vrot.slane %v72, %v79
    %82 = vbcast.lane.b32.xlu0 %v80, 256
    %v83 = vpop.permute.xlu0 %82
    %v84 = vlaneseq
    %v85 = vshrl.u32 %v84, 7
    %v86 = vsub.s32 1, %v85
    %v87 = vrot.slane %v72, %v86
    %89 = vbcast.lane.b32.xlu0 %v87, 256
    %v90 = vpop.permute.xlu0 %89
    %v91 = vmul.f32 %v83, %v29
    %v92 = vmul.f32 %v90, %v30
    %v93 = vsel %vm41, %v91, 0.0
    %v94 = vrot.slane %v93, 4
    %v95 = vadd.f32 %v93, %v94
    %v96 = vrot.slane %v95, 2
    %v97 = vadd.f32 %v95, %v96
    %v98 = vrot.slane %v97, 1
    %v99 = vadd.f32 %v97, %v98
    %v100 = vsel %vm41, %v92, 0.0
    %v101 = vrot.slane %v100, 4
    %v102 = vadd.f32 %v100, %v101
    %v103 = vrot.slane %v102, 2
    %v104 = vadd.f32 %v102, %v103
    %v105 = vrot.slane %v104, 1
    %v106 = vadd.f32 %v104, %v105
    %v108 = vrot.slane %v76, 1
    %v111 = vrcp.pop %v76
    %v112 = vmul.f32 %v99, %v111
    %v113 = vrcp.pop %v108
    %v114 = vmul.f32 %v106, %v113
    %v117 = vrot.slane %v114, 7
    %v118 = vsel %vm61, %v117, %v112
    %vm120 = vcmask 254976
    %121 = vst.msk [vmem:[#allocation5] sm:$0x3] %vm120, %v118
    // Predicated region
    $region18: #{tpu_custom_call.1} parent=1 // pred_check
      _
    $region19: #{tpu_custom_call.1} parent=1 // pred_check_branch
      %123 = sbr.rel (0) target = $region21
    $region20: #{tpu_custom_call.1} parent=1 // pred_region
      %s125 = ssub.s32 32, 32
      %126 = vsyncadd [#allocation4], %s125
      %s128 = sshll.u32 [#allocation5], 4
      %s129 = int_to_ptr.vmem [resolvable:$true] %s128
      %131 = dma.vmem_to_hbm [thread:$0]  %s129, 32, %s3, [#allocation4]
    $region21: #{tpu_custom_call.1} parent=1 // pred_fallthru
      _
    // Predicated region
    $region22: #{tpu_custom_call.1} parent=1 // pred_check
      _
    $region23: #{tpu_custom_call.1} parent=1 // pred_check_branch
      %133 = sbr.rel (0) target = $region25
    $region24: #{tpu_custom_call.1} parent=1 // pred_region
      %134 = dma.done [#allocation4], 32
    $region25: #{tpu_custom_call.1} parent=1 // pred_fallthru
      _
    %135 = vsyncpa [#allocation3], 1
    %136 = vsyncpa [#allocation4], 1

</llo_original>
